<compile_context>
chip_gen: v6e
topology: v6e:2x2x1
jax: 0.10.0
libtpu: 0.0.40
codegen_flags: <defaults>
</compile_context>

<pallas_src>
import functools

import jax
import jax.numpy as jnp
import numpy as np
from jax.experimental import pallas as pl
from jax.experimental.pallas import tpu as pltpu

_NEG_PAD = -1e30  # pad value for out-of-range class columns / batch rows


def _round_up(x, m):
    return ((x + m - 1) // m) * m


def _amsoftmax_kernel(x_ref, targets_ref, margins_ref, out_ref,
                      m_scr, l_scr, t_scr, *, scale):
    c_idx = pl.program_id(1)

    @pl.when(c_idx == 0)
    def _():
        m_scr[...] = jnp.full_like(m_scr, -jnp.inf)
        l_scr[...] = jnp.zeros_like(l_scr)
        t_scr[...] = jnp.zeros_like(t_scr)

    x = x_ref[...].astype(jnp.float32)                 # (TB, TC) f32 tile
    tgt = targets_ref[...]                             # (TB, 1) int32
    mar = margins_ref[...].astype(jnp.float32)         # (TB, 1) f32

    tb, tc = x.shape
    # Global class index of each lane in this tile.
    col = jax.lax.broadcasted_iota(jnp.int32, (tb, tc), 1) + c_idx * tc
    mask = col == tgt                                   # target hits exactly one lane

    # logits = scale * (x - one_hot * margin), fused via select (no one_hot temp).
    logits = scale * jnp.where(mask, x - mar, x)        # (TB, TC)

    # Online (streaming) logsumexp over the class axis.
    m_prev = m_scr[...]
    m_new = jnp.maximum(m_prev, jnp.max(logits, axis=-1, keepdims=True))
    alpha = jnp.exp(m_prev - m_new)                     # rescale of previous sum
    l_scr[...] = alpha * l_scr[...] + jnp.sum(jnp.exp(logits - m_new),
                                              axis=-1, keepdims=True)
    m_scr[...] = m_new
    # Target logit: lands in exactly one C tile; accumulate across tiles.
    t_scr[...] = t_scr[...] + jnp.sum(jnp.where(mask, logits, 0.0),
                                      axis=-1, keepdims=True)

    @pl.when(c_idx == pl.num_programs(1) - 1)
    def _():
        lse = m_scr[...] + jnp.log(l_scr[...])          # single log per row
        per_row = lse - t_scr[...]                      # (TB, 1) cross-entropy
        out_ref[...] = jnp.broadcast_to(per_row, out_ref.shape)  # lane-dense write


def am_softmax_loss(outputs, targets, durations=None, *, scale=15.0,
                    adaptive_margin=False, m_a=3 / 50, m_b=7 / 50, m=0.2,
                    block_b=128, block_c=2048):
    """Pallas TPU implementation of AMSoftmaxLoss.forward.

    outputs:   (B, C) float (f32 or bf16) cosine similarities
    targets:   (B,)   int class ids
    durations: (B,)   float seconds, required iff adaptive_margin
    Returns a scalar float32 loss (mean cross entropy).
    """
    B, C = outputs.shape
    if adaptive_margin:
        if durations is None:
            raise ValueError("Durations must be provided when using adaptive margin")
        margins = m_a * durations.astype(jnp.float32) + m_b
    else:
        margins = jnp.full((B,), m, dtype=jnp.float32)

    # Lane-dense tiles: TB multiple of 8, TC multiple of 128 (capped for VMEM).
    tb = min(block_b, _round_up(B, 8))
    tc = min(block_c, _round_up(C, 128))
    b_pad = _round_up(B, tb)
    c_pad = _round_up(C, tc)

    x = outputs
    if (b_pad, c_pad) != (B, C):
        # Padded lanes/rows get a huge negative value -> exp() underflows to 0.
        x = jnp.pad(x, ((0, b_pad - B), (0, c_pad - C)), constant_values=_NEG_PAD)
    tgt_col = jnp.pad(targets.astype(jnp.int32), (0, b_pad - B)).reshape(b_pad, 1)
    mar_col = jnp.pad(margins.astype(jnp.float32), (0, b_pad - B)).reshape(b_pad, 1)

    grid = (b_pad // tb, c_pad // tc)

    per_row = pl.pallas_call(
        functools.partial(_amsoftmax_kernel, scale=float(scale)),
        out_shape=jax.ShapeDtypeStruct((b_pad, 128), jnp.float32),
        grid_spec=pltpu.PrefetchScalarGridSpec(
            num_scalar_prefetch=0,
            grid=grid,
            in_specs=[
                # Big operand: tiled over (B, C); pipelined across the C axis.
                pl.BlockSpec((tb, tc), lambda b, c: (b, c)),
                # Tiny per-row operands: indexed by B only (resident across C).
                pl.BlockSpec((tb, 1), lambda b, c: (b, 0)),
                pl.BlockSpec((tb, 1), lambda b, c: (b, 0)),
            ],
            out_specs=pl.BlockSpec((tb, 128), lambda b, c: (b, 0)),
            scratch_shapes=[
                pltpu.VMEM((tb, 1), jnp.float32),   # running max
                pltpu.VMEM((tb, 1), jnp.float32),   # running exp-sum
                pltpu.VMEM((tb, 1), jnp.float32),   # target-logit accumulator
            ],
        ),
        compiler_params=pltpu.CompilerParams(
            dimension_semantics=("parallel", "arbitrary")),
    )(x, tgt_col, mar_col)

    # Batch mean over the true batch size (padded rows excluded) done in XLA:
    # safe under B-axis "parallel" (no cross-core accumulation in-kernel).
    return jnp.sum(per_row[:B, 0]) / B


def _reference_loss(outputs, targets, durations=None, *, scale=15.0,
                    adaptive_margin=False, m_a=3 / 50, m_b=7 / 50, m=0.2):
    B, C = outputs.shape
    if adaptive_margin:
        margins = m_a * durations.astype(jnp.float32) + m_b
    else:
        margins = jnp.ones((B,), jnp.float32) * m
    one_hot = jax.nn.one_hot(targets, C, dtype=jnp.float32)
    logits = (outputs.astype(jnp.float32) - one_hot * margins[:, None]) * scale
    logp = jax.nn.log_softmax(logits, axis=-1)
    return -jnp.mean(jnp.sum(one_hot * logp, axis=-1))


if __name__ == "__main__":
    key = jax.random.PRNGKey(0)
    k1, k2, k3 = jax.random.split(key, 3)

    # Small shapes consistent with the module (lane-unaligned C exercises padding).
    B, C = 8, 32
    outputs = jnp.tanh(jax.random.normal(k1, (B, C), dtype=jnp.float32))
    targets = jax.random.randint(k2, (B,), 0, C, dtype=jnp.int32)
    durations = jax.random.uniform(k3, (B,), minval=1.0, maxval=10.0,
                                   dtype=jnp.float32)

    # Fixed-margin case.
    loss_fixed = am_softmax_loss(outputs, targets)
    jax.block_until_ready(loss_fixed)
    np.testing.assert_allclose(np.asarray(loss_fixed),
                               np.asarray(_reference_loss(outputs, targets)),
                               rtol=1e-5, atol=1e-5)

    # Adaptive-margin case.
    loss_adapt = am_softmax_loss(outputs, targets, durations,
                                 adaptive_margin=True)
    jax.block_until_ready(loss_adapt)
    np.testing.assert_allclose(
        np.asarray(loss_adapt),
        np.asarray(_reference_loss(outputs, targets, durations,
                                   adaptive_margin=True)),
        rtol=1e-5, atol=1e-5)

    # Multi-tile path: 2 B-tiles x 3 C-tiles -> exercises B/C padding, the
    # online logsumexp across C tiles, and the resident per-row accumulators.
    k4, k5, k6 = jax.random.split(jax.random.PRNGKey(1), 3)
    B2, C2 = 12, 300
    outputs2 = jnp.tanh(jax.random.normal(k4, (B2, C2), dtype=jnp.float32))
    targets2 = jax.random.randint(k5, (B2,), 0, C2, dtype=jnp.int32)
    durations2 = jax.random.uniform(k6, (B2,), minval=1.0, maxval=10.0,
                                    dtype=jnp.float32)
    loss_tiled = am_softmax_loss(outputs2, targets2, durations2,
                                 adaptive_margin=True, block_b=8, block_c=128)
    jax.block_until_ready(loss_tiled)
    np.testing.assert_allclose(
        np.asarray(loss_tiled),
        np.asarray(_reference_loss(outputs2, targets2, durations2,
                                   adaptive_margin=True)),
        rtol=1e-5, atol=1e-5)

    print("KERNEL_OK")
</pallas_src>

<mosaic_0001>
module attributes {stable_mosaic.version = 11 : i64} {
  func.func @_amsoftmax_kernel(%arg0: i32, %arg1: i32, %arg2: memref<8x128xf32, #tpu.memory_space<vmem>>, %arg3: memref<8x1xi32, #tpu.memory_space<vmem>>, %arg4: memref<8x1xf32, #tpu.memory_space<vmem>>, %arg5: memref<8x128xf32, #tpu.memory_space<vmem>>, %arg6: memref<8x1xf32, #tpu.memory_space<vmem>>, %arg7: memref<8x1xf32, #tpu.memory_space<vmem>>, %arg8: memref<8x1xf32, #tpu.memory_space<vmem>>) attributes {dimension_semantics = [#tpu.dimension_semantics<parallel>, #tpu.dimension_semantics<arbitrary>], iteration_bounds = array<i64: 1, 1>, scalar_prefetch = 0 : i64, scratch_operands = 3 : i64, tpu.core_type = #tpu.core_type<tc>, window_params = [{transform_indices = @transform_0, window_bounds = array<i64: 8, 128>}, {transform_indices = @transform_1, window_bounds = array<i64: 8, 1>}, {transform_indices = @transform_2, window_bounds = array<i64: 8, 1>}, {transform_indices = @transform_3, window_bounds = array<i64: 8, 128>}]} {
    %c0_i32 = arith.constant 0 : i32
    %0 = arith.cmpi eq, %arg1, %c0_i32 : i32
    %1 = arith.extui %0 : i1 to i32
    %c0_i32_0 = arith.constant 0 : i32
    %2 = arith.cmpi ne, %1, %c0_i32_0 : i32
    scf.if %2 {
      %cst_24 = arith.constant 0xFF800000 : f32
      %43 = vector.broadcast %cst_24 : f32 to vector<8x1xf32>
      %c0_25 = arith.constant 0 : index
      %c0_26 = arith.constant 0 : index
      %44 = vector.load %arg6[%c0_25, %c0_26] : memref<8x1xf32, #tpu.memory_space<vmem>>, vector<8x1xf32>
      tpu.vector_store %arg6[%c0_25, %c0_26], %43 {strides = array<i32>} : memref<8x1xf32, #tpu.memory_space<vmem>>, vector<8x1xf32>,
      %cst_27 = arith.constant 0.000000e+00 : f32
      %45 = vector.broadcast %cst_27 : f32 to vector<8x1xf32>
      %c0_28 = arith.constant 0 : index
      %c0_29 = arith.constant 0 : index
      %46 = vector.load %arg7[%c0_28, %c0_29] : memref<8x1xf32, #tpu.memory_space<vmem>>, vector<8x1xf32>
      tpu.vector_store %arg7[%c0_28, %c0_29], %45 {strides = array<i32>} : memref<8x1xf32, #tpu.memory_space<vmem>>, vector<8x1xf32>,
      %cst_30 = arith.constant 0.000000e+00 : f32
      %47 = vector.broadcast %cst_30 : f32 to vector<8x1xf32>
      %c0_31 = arith.constant 0 : index
      %c0_32 = arith.constant 0 : index
      %48 = vector.load %arg8[%c0_31, %c0_32] : memref<8x1xf32, #tpu.memory_space<vmem>>, vector<8x1xf32>
      tpu.vector_store %arg8[%c0_31, %c0_32], %47 {strides = array<i32>} : memref<8x1xf32, #tpu.memory_space<vmem>>, vector<8x1xf32>,
    } else {
    }
    %c0 = arith.constant 0 : index
    %c0_1 = arith.constant 0 : index
    %3 = vector.load %arg2[%c0, %c0_1] : memref<8x128xf32, #tpu.memory_space<vmem>>, vector<8x128xf32>
    %c0_2 = arith.constant 0 : index
    %c0_3 = arith.constant 0 : index
    %4 = vector.load %arg3[%c0_2, %c0_3] : memref<8x1xi32, #tpu.memory_space<vmem>>, vector<8x1xi32>
    %c0_4 = arith.constant 0 : index
    %c0_5 = arith.constant 0 : index
    %5 = vector.load %arg4[%c0_4, %c0_5] : memref<8x1xf32, #tpu.memory_space<vmem>>, vector<8x1xf32>
    %6 = tpu.iota {dimensions = array<i32: 1>} : vector<8x128xi32>
    %c128_i32 = arith.constant 128 : i32
    %7 = arith.muli %arg1, %c128_i32 : i32
    %8 = vector.broadcast %7 : i32 to vector<8x128xi32>
    %9 = arith.addi %6, %8 : vector<8x128xi32>
    %10 = vector.broadcast %4 : vector<8x1xi32> to vector<8x128xi32>
    %11 = arith.cmpi eq, %9, %10 : vector<8x128xi32>
    %12 = vector.broadcast %5 : vector<8x1xf32> to vector<8x128xf32>
    %13 = arith.subf %3, %12 : vector<8x128xf32>
    %14 = arith.select %11, %13, %3 : vector<8x128xi1>, vector<8x128xf32>
    %cst = arith.constant 1.500000e+01 : f32
    %15 = vector.broadcast %cst : f32 to vector<8x128xf32>
    %16 = arith.mulf %15, %14 : vector<8x128xf32>
    %c0_6 = arith.constant 0 : index
    %c0_7 = arith.constant 0 : index
    %17 = vector.load %arg6[%c0_6, %c0_7] : memref<8x1xf32, #tpu.memory_space<vmem>>, vector<8x1xf32>
    %cst_8 = arith.constant dense<0xFF800000> : vector<8xf32>
    %18 = vector.multi_reduction <maximumf>, %16, %cst_8 [1] : vector<8x128xf32> to vector<8xf32>
    %19 = vector.shape_cast %18 : vector<8xf32> to vector<8x1xf32>
    %20 = arith.maximumf %17, %19 : vector<8x1xf32>
    %21 = arith.subf %17, %20 : vector<8x1xf32>
    %22 = math.exp %21 : vector<8x1xf32>
    %c0_9 = arith.constant 0 : index
    %c0_10 = arith.constant 0 : index
    %23 = vector.load %arg7[%c0_9, %c0_10] : memref<8x1xf32, #tpu.memory_space<vmem>>, vector<8x1xf32>
    %24 = arith.mulf %22, %23 : vector<8x1xf32>
    %25 = vector.broadcast %20 : vector<8x1xf32> to vector<8x128xf32>
    %26 = arith.subf %16, %25 : vector<8x128xf32>
    %27 = math.exp %26 : vector<8x128xf32>
    %cst_11 = arith.constant dense<0.000000e+00> : vector<8xf32>
    %28 = vector.multi_reduction <add>, %27, %cst_11 [1] : vector<8x128xf32> to vector<8xf32>
    %29 = vector.shape_cast %28 : vector<8xf32> to vector<8x1xf32>
    %30 = arith.addf %24, %29 : vector<8x1xf32>
    %c0_12 = arith.constant 0 : index
    %c0_13 = arith.constant 0 : index
    %31 = vector.load %arg7[%c0_12, %c0_13] : memref<8x1xf32, #tpu.memory_space<vmem>>, vector<8x1xf32>
    tpu.vector_store %arg7[%c0_12, %c0_13], %30 {strides = array<i32>} : memref<8x1xf32, #tpu.memory_space<vmem>>, vector<8x1xf32>,
    %c0_14 = arith.constant 0 : index
    %c0_15 = arith.constant 0 : index
    %32 = vector.load %arg6[%c0_14, %c0_15] : memref<8x1xf32, #tpu.memory_space<vmem>>, vector<8x1xf32>
    tpu.vector_store %arg6[%c0_14, %c0_15], %20 {strides = array<i32>} : memref<8x1xf32, #tpu.memory_space<vmem>>, vector<8x1xf32>,
    %c0_16 = arith.constant 0 : index
    %c0_17 = arith.constant 0 : index
    %33 = vector.load %arg8[%c0_16, %c0_17] : memref<8x1xf32, #tpu.memory_space<vmem>>, vector<8x1xf32>
    %cst_18 = arith.constant 0.000000e+00 : f32
    %34 = vector.broadcast %cst_18 : f32 to vector<8x128xf32>
    %35 = arith.select %11, %16, %34 : vector<8x128xi1>, vector<8x128xf32>
    %cst_19 = arith.constant dense<0.000000e+00> : vector<8xf32>
    %36 = vector.multi_reduction <add>, %35, %cst_19 [1] : vector<8x128xf32> to vector<8xf32>
    %37 = vector.shape_cast %36 : vector<8xf32> to vector<8x1xf32>
    %38 = arith.addf %33, %37 : vector<8x1xf32>
    %c0_20 = arith.constant 0 : index
    %c0_21 = arith.constant 0 : index
    %39 = vector.load %arg8[%c0_20, %c0_21] : memref<8x1xf32, #tpu.memory_space<vmem>>, vector<8x1xf32>
    tpu.vector_store %arg8[%c0_20, %c0_21], %38 {strides = array<i32>} : memref<8x1xf32, #tpu.memory_space<vmem>>, vector<8x1xf32>,
    %c0_i32_22 = arith.constant 0 : i32
    %40 = arith.cmpi eq, %arg1, %c0_i32_22 : i32
    %41 = arith.extui %40 : i1 to i32
    %c0_i32_23 = arith.constant 0 : i32
    %42 = arith.cmpi ne, %41, %c0_i32_23 : i32
    scf.if %42 {
      %c0_24 = arith.constant 0 : index
      %c0_25 = arith.constant 0 : index
      %43 = vector.load %arg6[%c0_24, %c0_25] : memref<8x1xf32, #tpu.memory_space<vmem>>, vector<8x1xf32>
      %c0_26 = arith.constant 0 : index
      %c0_27 = arith.constant 0 : index
      %44 = vector.load %arg7[%c0_26, %c0_27] : memref<8x1xf32, #tpu.memory_space<vmem>>, vector<8x1xf32>
      %45 = math.log %44 : vector<8x1xf32>
      %46 = arith.addf %43, %45 : vector<8x1xf32>
      %c0_28 = arith.constant 0 : index
      %c0_29 = arith.constant 0 : index
      %47 = vector.load %arg8[%c0_28, %c0_29] : memref<8x1xf32, #tpu.memory_space<vmem>>, vector<8x1xf32>
      %48 = arith.subf %46, %47 : vector<8x1xf32>
      %49 = vector.shape_cast %48 : vector<8x1xf32> to vector<8x1xf32>
      %50 = vector.broadcast %49 : vector<8x1xf32> to vector<8x128xf32>
      %c0_30 = arith.constant 0 : index
      %c0_31 = arith.constant 0 : index
      %51 = vector.load %arg5[%c0_30, %c0_31] : memref<8x128xf32, #tpu.memory_space<vmem>>, vector<8x128xf32>
      tpu.vector_store %arg5[%c0_30, %c0_31], %50 {strides = array<i32>} : memref<8x128xf32, #tpu.memory_space<vmem>>, vector<8x128xf32>,
    } else {
    }
    return
  }
  func.func @transform_0(%arg0: i32, %arg1: i32) -> (i32, i32) {
    %c0_i32 = arith.constant 0 : i32
    return %arg0, %arg1 : i32, i32
  }
  func.func @transform_1(%arg0: i32, %arg1: i32) -> (i32, i32) {
    %c0_i32 = arith.constant 0 : i32
    %c0_i32_0 = arith.constant 0 : i32
    return %arg0, %c0_i32 : i32, i32
  }
  func.func @transform_2(%arg0: i32, %arg1: i32) -> (i32, i32) {
    %c0_i32 = arith.constant 0 : i32
    %c0_i32_0 = arith.constant 0 : i32
    return %arg0, %c0_i32 : i32, i32
  }
  func.func @transform_3(%arg0: i32, %arg1: i32) -> (i32, i32) {
    %c0_i32 = arith.constant 0 : i32
    %c0_i32_0 = arith.constant 0 : i32
    return %arg0, %c0_i32 : i32, i32
  }
}

</mosaic_0001>

<llo_original>
// kernel: tpu_custom_call.1
$region0: #{tpu_custom_call.1}
  #allocation0 [shape = 'u32[]', space=smem, size = 0x4, offset = 0x4, fixed_abs, tag = 'smem constant byte address 0x4 - core index']
  #allocation1 [shape = 'u32[144,128]{1,0:T(1,128)}', space=vmem, size = 0x12000, scoped, tag = 'internal scratch']
  #allocation2 [shape = 'f32[8,1]{1,0:T(8,128)}', space=vmem, size = 0x1000, scoped, tag = 'scratch operand']
  #allocation3 [shape = 'f32[8,1]{1,0:T(8,128)}', space=vmem, size = 0x1000, scoped, tag = 'scratch operand']
  #allocation4 [shape = 'f32[8,1]{1,0:T(8,128)}', space=vmem, size = 0x1000, scoped, tag = 'scratch operand']
  %s0 = inlined_call_operand.vmem [shape: f32[8,128], index: 0, kind: input, shape index: {}]
  %s1 = inlined_call_operand.vmem [shape: s32[8,1], index: 1, kind: input, shape index: {}]
  %s2 = inlined_call_operand.vmem [shape: f32[8,1], index: 2, kind: input, shape index: {}]
  %s3 = inlined_call_operand.hbm [shape: f32[8,128], index: 3, kind: output, shape index: {}]
  %s4 = sld [smem:[#allocation0]]
  $region30: #{tpu_custom_call.1} parent=0
    _
  %s6 = ssub.s32 1, %s4
  %s7 = scalar_select 0, %s6, %s4
  $region1: #{tpu_custom_call.1} parent=0
    #allocation5 [shape = 'u8[4096]{0}', space=vmem, size = 0x1000, scoped, tag = 'output window, operand 0, single buffered']
    #allocation6 [shape = 's32[1]{0}', space=sflag, size = 0x4, scoped, tag = 'scoped memory for tpu_custom_call.1']
    %8 = vsyncpa [#allocation6], 0
    // Predicated region
    $region2: #{tpu_custom_call.1} parent=1 // pred_check
      _
    $region3: #{tpu_custom_call.1} parent=1 // pred_check_branch
      %10 = sbr.rel (0) target = $region5
    $region4: #{tpu_custom_call.1} parent=1 // pred_region
      _
    $region5: #{tpu_custom_call.1} parent=1 // pred_fallthru
      _
    // Predicated region
    $region6: #{tpu_custom_call.1} parent=1 // pred_check
      _
    $region7: #{tpu_custom_call.1} parent=1 // pred_check_branch
      %12 = sbr.rel (0) target = $region9
    $region8: #{tpu_custom_call.1} parent=1 // pred_region
      _
    $region9: #{tpu_custom_call.1} parent=1 // pred_fallthru
      _
    // Predicated region
    $region10: #{tpu_custom_call.1} parent=1 // pred_check
      _
    $region11: #{tpu_custom_call.1} parent=1 // pred_check_branch
      %14 = sbr.rel (0) target = $region13
    $region12: #{tpu_custom_call.1} parent=1 // pred_region
      _
    $region13: #{tpu_custom_call.1} parent=1 // pred_fallthru
      _
    %p15 = scmp.eq.s32.totalorder 0, 0
    // Predicated region
    $region14: #{tpu_custom_call.1} parent=1 // pred_check
      %p16 = pneg %p15
    $region15: #{tpu_custom_call.1} parent=1 // pred_check_branch
      %18 = sbr.rel (%p16) target = $region17
    $region16: #{tpu_custom_call.1} parent=1 // pred_region
      %vm19 = vcmask 7168
      %20 = vst.msk [vmem:[#allocation2] sm:$0xff] %vm19, -inf
      %21 = vst.msk [vmem:[#allocation3] sm:$0xff] %vm19, 0.0
      %22 = vst.msk [vmem:[#allocation4] sm:$0xff] %vm19, 0.0
    $region17: #{tpu_custom_call.1} parent=1 // pred_fallthru
      _
    %v23 = vld [vmem:[%s0] sm:$0xff]
    %v24 = vld [vmem:[%s1] sm:$0xff]
    %v25 = vld [vmem:[%s2] sm:$0xff]
    %v26 = vlaneseq
    %v27 = vand.u32 %v26, 127
    %s28 = smul.u32 0, 128
    %v29 = vstv %s28
    %v30 = vadd.s32 %v27, %v29
    %31 = vset.pattern.permute.xlu0 0
    %32 = vperm.xlu0 %31, %v24
    %v33 = vpop.permute.xlu0 %32
    %vm34 = vcmp.eq.s32.totalorder %v30, %v33
    %36 = vset.pattern.permute.xlu0 0
    %37 = vperm.xlu0 %36, %v25
    %v38 = vpop.permute.xlu0 %37
    %v40 = vsub.f32 %v23, %v38
    %v41 = vsel %vm34, %v40, %v23
    %v42 = vmul.f32 %v41, 15.0
    %v43 = vld [vmem:[#allocation2] sm:$0xff]
    %44 = vmax.xlane.f32.xlu0 %v42
    %v45 = vpop.xlane.xlu0 %44
    %v46 = vmax.f32 %v43, %v45
    %v47 = vsub.f32 %v43, %v46
    %v48 = vmul.f32 %v47, 1.442695
    %v49 = vpow.pop %v48
    %v50 = vld [vmem:[#allocation3] sm:$0xff]
    %v51 = vmul.f32 %v49, %v50
    %53 = vset.pattern.permute.xlu0 0
    %54 = vperm.xlu0 %53, %v46
    %v55 = vpop.permute.xlu0 %54
    %v57 = vsub.f32 %v42, %v55
    %v58 = vmul.f32 %v57, 1.442695
    %v59 = vpow.pop %v58
    %60 = vadd.xlane.f32.xlu0 %v59
    %v61 = vpop.xlane.xlu0 %60
    %v62 = vadd.f32 %v51, %v61
    %vm63 = vcmask 7168
    %64 = vst.msk [vmem:[#allocation3] sm:$0xff] %vm63, %v62
    %65 = vst.msk [vmem:[#allocation2] sm:$0xff] %vm63, %v46
    %v66 = vld [vmem:[#allocation4] sm:$0xff]
    %v67 = vsel %vm34, %v42, 0.0
    %68 = vadd.xlane.f32.xlu0 %v67
    %v69 = vpop.xlane.xlu0 %68
    %v70 = vadd.f32 %v66, %v69
    %71 = vst.msk [vmem:[#allocation4] sm:$0xff] %vm63, %v70
    // Predicated region
    $region18: #{tpu_custom_call.1} parent=1 // pred_check
      %p72 = pneg %p15
    $region19: #{tpu_custom_call.1} parent=1 // pred_check_branch
      %74 = sbr.rel (%p72) target = $region21
    $region20: #{tpu_custom_call.1} parent=1 // pred_region
      %v75 = vld [vmem:[#allocation2] sm:$0xff]
      %v76 = vld [vmem:[#allocation3] sm:$0xff]
      %v77 = vlog2.pop %v76
      %v78 = vmul.f32 %v77, 0.6931472
      %v79 = vadd.f32 %v75, %v78
      %v80 = vld [vmem:[#allocation4] sm:$0xff]
      %v81 = vsub.f32 %v79, %v80
      %83 = vset.pattern.permute.xlu0 0
      %84 = vperm.xlu0 %83, %v81
      %v85 = vpop.permute.xlu0 %84
      %87 = vst [vmem:[#allocation5] sm:$0xff] %v85
    $region21: #{tpu_custom_call.1} parent=1 // pred_fallthru
      _
    // Predicated region
    $region22: #{tpu_custom_call.1} parent=1 // pred_check
      _
    $region23: #{tpu_custom_call.1} parent=1 // pred_check_branch
      %89 = sbr.rel (0) target = $region25
    $region24: #{tpu_custom_call.1} parent=1 // pred_region
      %s91 = ssub.s32 128, 128
      %92 = vsyncadd [#allocation6], %s91
      %s94 = sshll.u32 [#allocation5], 4
      %s95 = int_to_ptr.vmem [resolvable:$true] %s94
      %97 = dma.vmem_to_hbm [thread:$0]  %s95, 128, %s3, [#allocation6]
    $region25: #{tpu_custom_call.1} parent=1 // pred_fallthru
      _
    // Predicated region
    $region26: #{tpu_custom_call.1} parent=1 // pred_check
      _
    $region27: #{tpu_custom_call.1} parent=1 // pred_check_branch
      %99 = sbr.rel (0) target = $region29
    $region28: #{tpu_custom_call.1} parent=1 // pred_region
      %100 = dma.done [#allocation6], 128
    $region29: #{tpu_custom_call.1} parent=1 // pred_fallthru
      _
    %101 = vsyncpa [#allocation6], 1

</llo_original>
